<compile_context>
chip_gen: v5e
topology: v5e:2x2
jax: 0.10.0
libtpu: 0.0.40
codegen_flags: <defaults>
</compile_context>

<pallas_src>
import jax
import jax.numpy as jnp
from jax.experimental import pallas as pl
from jax.experimental.pallas import tpu as pltpu


def _quadratic_kernel(params_ref, pcol_ref, out_ref):
    # params_ref : (3, OIb)  rows = [log_std_axis0, log_std_axis1, corr]
    # pcol_ref   : (KK, 3)   cols = [px*px, px*py, py*py]   (grid-invariant)
    # out_ref    : (KK, OIb)
    log_s1 = params_ref[0:1, :]                    # (1, OIb)
    log_s2 = params_ref[1:2, :]                    # (1, OIb)
    r = params_ref[2:3, :]                         # (1, OIb)

    # Row-only transcendental / divide work (1 of 8 sublanes, cheap).
    inv_s1 = jnp.exp(-log_s1)                      # 1 / s1
    inv_s2 = jnp.exp(-log_s2)                      # 1 / s2
    one_m_r2 = jnp.maximum(1.0 - r * r, 1e-12)     # guard |r| -> 1 (inf/NaN)
    q2 = 1.0 / one_m_r2                            # 1 / (1 - r^2), row-only

    # Quadratic-form coefficients, negation folded in (row-only).
    c_a = -(q2 * inv_s1 * inv_s1)                  # coeff of px^2
    c_c = -(q2 * inv_s2 * inv_s2)                  # coeff of py^2
    c_b = 2.0 * (r * q2) * (inv_s1 * inv_s2)       # coeff of px*py

    # Column temporaries come in precomputed: (KK, 1) each.
    px2 = pcol_ref[:, 0:1]
    pxpy = pcol_ref[:, 1:2]
    py2 = pcol_ref[:, 2:3]

    # Full tile: 3 mul + 2 add per element, broadcast (KK,1) x (1,OIb).
    out_ref[...] = px2 * c_a + pxpy * c_b + py2 * c_c


def _round_up(x, m):
    return -(-x // m) * m


def _pick_oi_block(OI, KK):
    """Lane-axis block size from a VMEM budget (double-buffered f32 blocks)."""
    kk_pad = _round_up(KK, 8)
    # bytes per lane, double-buffered: output block rows + (padded) params rows
    per_lane = 2 * 4 * (kk_pad + 8)
    budget = 24 * 1024 * 1024                       # fits all generations' scoped VMEM
    max_lanes = max(128, min(65536, (budget // per_lane) // 128 * 128))
    if OI <= max_lanes:
        if OI >= 16 * 128:
            # Split into >=2 128-aligned blocks so the "parallel" grid axis can
            # shard across v7x's two TensorCores (balanced remainder block).
            oi_block = min(max_lanes, _round_up(pl.cdiv(OI, 2), 128))
        else:
            oi_block = OI                           # full lane extent (== array dim)
    else:
        oi_block = max_lanes
    return oi_block


def quadratic_kernel_cholesky_2d(log_std, corr, kernel_size, *, layout="OIHW"):
    """log_std: (2, O, I), corr: (O, I) -> (O, I, K, K) [OIHW] or (K, K, O, I) [HWOI]."""
    two, O, I = log_std.shape
    assert two == 2
    K = kernel_size
    OI, KK = O * I, K * K

    # Pack the three per-(o, i) scalars into one lane-dense (3, OI) array.
    params = jnp.stack(
        [log_std[0].reshape(OI), log_std[1].reshape(OI), corr.reshape(OI)],
        axis=0,
    ).astype(jnp.float32)                           # (3, OI)

    # Position-grid column temporaries, matching make_pos_grid(grid_at_end=True):
    # 'ij' meshgrid of centered coords, flattened row-major.
    ax = jnp.arange(K, dtype=jnp.float32) - (K - 1) / 2.0
    yy, xx = jnp.meshgrid(ax, ax, indexing="ij")
    px = yy.reshape(KK)                             # pos[0] (row coord)
    py = xx.reshape(KK)                             # pos[1] (col coord)
    pcol = jnp.stack([px * px, px * py, py * py], axis=-1)  # (KK, 3)

    oi_block = _pick_oi_block(OI, KK)
    grid = (pl.cdiv(OI, oi_block),)

    out_flat = pl.pallas_call(
        _quadratic_kernel,
        out_shape=jax.ShapeDtypeStruct((KK, OI), jnp.float32),
        grid=grid,
        in_specs=[
            pl.BlockSpec((3, oi_block), lambda i: (0, i)),
            pl.BlockSpec((KK, 3), lambda i: (0, 0)),
        ],
        out_specs=pl.BlockSpec((KK, oi_block), lambda i: (0, i)),
        compiler_params=pltpu.CompilerParams(
            dimension_semantics=("parallel",),
            vmem_limit_bytes=32 * 1024 * 1024,
        ),
    )(params, pcol)

    hwoi = out_flat.reshape(K, K, O, I)             # free row-major reshape
    if layout == "HWOI":
        # Zero-copy layout: feed consumers via dimension_numbers (rhs_spec='HWOI').
        return hwoi
    # Module-exact OIHW view: one XLA transpose (the only extra HBM round trip;
    # prefer layout="HWOI" when the consumer can take it).
    return jnp.transpose(hwoi, (2, 3, 0, 1))


def _reference(log_std, corr, K):
    """Plain-JAX forward substitution mirroring torch.linalg.solve_triangular."""
    ax = jnp.arange(K, dtype=jnp.float32) - (K - 1) / 2.0
    yy, xx = jnp.meshgrid(ax, ax, indexing="ij")
    px = yy.reshape(-1)                             # (KK,)
    py = xx.reshape(-1)
    s1 = jnp.exp(log_std[0])[..., None]             # (O, I, 1)
    s2 = jnp.exp(log_std[1])[..., None]
    r = corr[..., None]
    b1 = px / s1
    b2 = (py - r * s2 * b1) / (s2 * jnp.sqrt(1.0 - r * r))
    dists = b1 * b1 + b2 * b2                       # (O, I, KK)
    return (-dists).reshape(corr.shape[0], corr.shape[1], K, K)


def _make_params(key, out_channels, in_channels):
    """Deterministic synthetic 'skewed'-style initialisation."""
    k1, k2, k3 = jax.random.split(key, 3)
    log_std_0 = jnp.log(jax.random.uniform(
        k1, (out_channels, in_channels), minval=1.0, maxval=2.0))
    log_std_1 = jnp.log(jax.random.uniform(
        k2, (out_channels, in_channels), minval=2.0, maxval=4.0))
    log_std = jnp.stack([log_std_0, log_std_1], axis=0)          # (2, O, I)
    corr = jnp.clip(
        0.3 * jax.random.normal(k3, (out_channels, in_channels)), -0.9, 0.9)
    return log_std.astype(jnp.float32), corr.astype(jnp.float32)


if __name__ == "__main__":
    key = jax.random.PRNGKey(0)
    configs = [
        (6, 5, 3),     # module docstring example: out=6, in=5, K=3
        (32, 64, 3),   # O*I = 2048 -> exercises the 2-block "parallel" split
        (4, 7, 5),     # odd K, unaligned O*I
    ]
    for idx, (O, I, K) in enumerate(configs):
        sub = jax.random.fold_in(key, idx)
        log_std, corr = _make_params(sub, O, I)

        out = quadratic_kernel_cholesky_2d(log_std, corr, K)      # OIHW
        out = jax.block_until_ready(out)
        assert out.shape == (O, I, K, K)

        ref = _reference(log_std, corr, K)
        assert jnp.allclose(out, ref, atol=1e-5, rtol=1e-5), (
            (O, I, K), float(jnp.max(jnp.abs(out - ref))))

        # Zero-copy HWOI path must agree too.
        out_hwoi = jax.block_until_ready(
            quadratic_kernel_cholesky_2d(log_std, corr, K, layout="HWOI"))
        assert out_hwoi.shape == (K, K, O, I)
        assert jnp.allclose(jnp.transpose(out_hwoi, (2, 3, 0, 1)), ref,
                            atol=1e-5, rtol=1e-5)

    print("KERNEL_OK")
</pallas_src>

<mosaic_0001>
module attributes {stable_mosaic.version = 11 : i64} {
  func.func @_quadratic_kernel(%arg0: i32, %arg1: memref<3x30xf32, #tpu.memory_space<vmem>>, %arg2: memref<9x3xf32, #tpu.memory_space<vmem>>, %arg3: memref<9x30xf32, #tpu.memory_space<vmem>>) attributes {dimension_semantics = [#tpu.dimension_semantics<parallel>], iteration_bounds = array<i64: 1>, scalar_prefetch = 0 : i64, scratch_operands = 0 : i64, tpu.core_type = #tpu.core_type<tc>, window_params = [{transform_indices = @transform_0, window_bounds = array<i64: 3, 30>}, {pipeline_mode = #tpu.pipeline_mode<synchronous>, transform_indices = @transform_1, window_bounds = array<i64: 9, 3>}, {transform_indices = @transform_2, window_bounds = array<i64: 9, 30>}]} {
    %c0 = arith.constant 0 : index
    %c0_0 = arith.constant 0 : index
    %0 = vector.load %arg1[%c0, %c0_0] : memref<3x30xf32, #tpu.memory_space<vmem>>, vector<1x30xf32>
    %c1 = arith.constant 1 : index
    %c0_1 = arith.constant 0 : index
    %1 = vector.load %arg1[%c1, %c0_1] : memref<3x30xf32, #tpu.memory_space<vmem>>, vector<1x30xf32>
    %c2 = arith.constant 2 : index
    %c0_2 = arith.constant 0 : index
    %2 = vector.load %arg1[%c2, %c0_2] : memref<3x30xf32, #tpu.memory_space<vmem>>, vector<1x30xf32>
    %cst = arith.constant 0.000000e+00 : f32
    %3 = vector.broadcast %cst : f32 to vector<1x30xf32>
    %4 = arith.subf %3, %0 : vector<1x30xf32>
    %5 = math.exp %4 : vector<1x30xf32>
    %cst_3 = arith.constant 0.000000e+00 : f32
    %6 = vector.broadcast %cst_3 : f32 to vector<1x30xf32>
    %7 = arith.subf %6, %1 : vector<1x30xf32>
    %8 = math.exp %7 : vector<1x30xf32>
    %9 = arith.mulf %2, %2 : vector<1x30xf32>
    %cst_4 = arith.constant 1.000000e+00 : f32
    %10 = vector.broadcast %cst_4 : f32 to vector<1x30xf32>
    %11 = arith.subf %10, %9 : vector<1x30xf32>
    %cst_5 = arith.constant 9.99999996E-13 : f32
    %12 = vector.broadcast %cst_5 : f32 to vector<1x30xf32>
    %13 = arith.maximumf %11, %12 : vector<1x30xf32>
    %cst_6 = arith.constant 1.000000e+00 : f32
    %14 = vector.broadcast %cst_6 : f32 to vector<1x30xf32>
    %15 = arith.divf %14, %13 : vector<1x30xf32>
    %16 = arith.mulf %15, %5 : vector<1x30xf32>
    %17 = arith.mulf %16, %5 : vector<1x30xf32>
    %cst_7 = arith.constant 0.000000e+00 : f32
    %18 = vector.broadcast %cst_7 : f32 to vector<1x30xf32>
    %19 = arith.subf %18, %17 : vector<1x30xf32>
    %20 = arith.mulf %15, %8 : vector<1x30xf32>
    %21 = arith.mulf %20, %8 : vector<1x30xf32>
    %cst_8 = arith.constant 0.000000e+00 : f32
    %22 = vector.broadcast %cst_8 : f32 to vector<1x30xf32>
    %23 = arith.subf %22, %21 : vector<1x30xf32>
    %24 = arith.mulf %2, %15 : vector<1x30xf32>
    %cst_9 = arith.constant 2.000000e+00 : f32
    %25 = vector.broadcast %cst_9 : f32 to vector<1x30xf32>
    %26 = arith.mulf %25, %24 : vector<1x30xf32>
    %27 = arith.mulf %5, %8 : vector<1x30xf32>
    %28 = arith.mulf %26, %27 : vector<1x30xf32>
    %c0_10 = arith.constant 0 : index
    %c0_11 = arith.constant 0 : index
    %29 = vector.load %arg2[%c0_10, %c0_11] : memref<9x3xf32, #tpu.memory_space<vmem>>, vector<9x1xf32>
    %c0_12 = arith.constant 0 : index
    %c1_13 = arith.constant 1 : index
    %30 = vector.load %arg2[%c0_12, %c1_13] : memref<9x3xf32, #tpu.memory_space<vmem>>, vector<9x1xf32>
    %c0_14 = arith.constant 0 : index
    %c2_15 = arith.constant 2 : index
    %31 = vector.load %arg2[%c0_14, %c2_15] : memref<9x3xf32, #tpu.memory_space<vmem>>, vector<9x1xf32>
    %32 = vector.broadcast %29 : vector<9x1xf32> to vector<9x30xf32>
    %33 = vector.broadcast %19 : vector<1x30xf32> to vector<9x30xf32>
    %34 = arith.mulf %32, %33 : vector<9x30xf32>
    %35 = vector.broadcast %30 : vector<9x1xf32> to vector<9x30xf32>
    %36 = vector.broadcast %28 : vector<1x30xf32> to vector<9x30xf32>
    %37 = arith.mulf %35, %36 : vector<9x30xf32>
    %38 = arith.addf %34, %37 : vector<9x30xf32>
    %39 = vector.broadcast %31 : vector<9x1xf32> to vector<9x30xf32>
    %40 = vector.broadcast %23 : vector<1x30xf32> to vector<9x30xf32>
    %41 = arith.mulf %39, %40 : vector<9x30xf32>
    %42 = arith.addf %38, %41 : vector<9x30xf32>
    %c0_16 = arith.constant 0 : index
    %c0_17 = arith.constant 0 : index
    %43 = vector.load %arg3[%c0_16, %c0_17] : memref<9x30xf32, #tpu.memory_space<vmem>>, vector<9x30xf32>
    tpu.vector_store %arg3[%c0_16, %c0_17], %42 {strides = array<i32>} : memref<9x30xf32, #tpu.memory_space<vmem>>, vector<9x30xf32>,
    return
  }
  func.func @transform_0(%arg0: i32) -> (i32, i32) {
    %c0_i32 = arith.constant 0 : i32
    %c0_i32_0 = arith.constant 0 : i32
    return %c0_i32, %arg0 : i32, i32
  }
  func.func @transform_1(%arg0: i32) -> (i32, i32) {
    %c0_i32 = arith.constant 0 : i32
    %c0_i32_0 = arith.constant 0 : i32
    %c0_i32_1 = arith.constant 0 : i32
    return %c0_i32, %c0_i32_0 : i32, i32
  }
  func.func @transform_2(%arg0: i32) -> (i32, i32) {
    %c0_i32 = arith.constant 0 : i32
    %c0_i32_0 = arith.constant 0 : i32
    return %c0_i32, %arg0 : i32, i32
  }
}

</mosaic_0001>

<llo_original>
// kernel: tpu_custom_call.1
$region0: #{tpu_custom_call.1}
  #allocation0 [shape = 'u32[]', space=smem, size = 0x4, offset = 0x4, fixed_abs, tag = 'smem constant byte address 0x4 - core index']
  #allocation1 [shape = 'u32[72,128]{1,0:T(1,128)}', space=vmem, size = 0x9000, scoped, tag = 'internal scratch']
  %s0 = inlined_call_operand.vmem [shape: f32[3,30], index: 0, kind: input, shape index: {}]
  %s1 = inlined_call_operand.vmem [shape: f32[9,3], index: 1, kind: input, shape index: {}]
  %s2 = inlined_call_operand.hbm [shape: f32[9,30], index: 2, kind: output, shape index: {}]
  %s3 = sld [smem:[#allocation0]]
  $region18: #{tpu_custom_call.1} parent=0
    _
  %s5 = ssub.s32 1, %s3
  %s6 = scalar_select 0, %s5, %s3
  $region1: #{tpu_custom_call.1} parent=0
    #allocation2 [shape = 'u8[8192]{0}', space=vmem, size = 0x2000, scoped, tag = 'output window, operand 0, single buffered']
    #allocation3 [shape = 's32[1]{0}', space=sflag, size = 0x4, scoped, tag = 'scoped memory for tpu_custom_call.1']
    %7 = vsyncpa [#allocation3], 0
    // Predicated region
    $region2: #{tpu_custom_call.1} parent=1 // pred_check
      _
    $region3: #{tpu_custom_call.1} parent=1 // pred_check_branch
      %9 = sbr.rel (0) target = $region5
    $region4: #{tpu_custom_call.1} parent=1 // pred_region
      _
    $region5: #{tpu_custom_call.1} parent=1 // pred_fallthru
      _
    // Predicated region
    $region6: #{tpu_custom_call.1} parent=1 // pred_check
      _
    $region7: #{tpu_custom_call.1} parent=1 // pred_check_branch
      %11 = sbr.rel (0) target = $region9
    $region8: #{tpu_custom_call.1} parent=1 // pred_region
      _
    $region9: #{tpu_custom_call.1} parent=1 // pred_fallthru
      _
    %v12 = vld [vmem:[%s0] sm:$0x1]
    %v13 = vld [vmem:[%s0 + $0x1] sm:$0x1]
    %v14 = vld [vmem:[%s0 + $0x2] sm:$0x1]
    %v15 = vsub.f32 0.0, %v12
    %v16 = vmul.f32 %v15, 1.442695
    %v17 = vpow.pop %v16
    %v18 = vsub.f32 0.0, %v13
    %v19 = vmul.f32 %v18, 1.442695
    %v20 = vpow.pop %v19
    %v21 = vmul.f32 %v14, %v14
    %v22 = vsub.f32 1.0, %v21
    %v23 = vmax.f32 %v22, 1e-12
    %v24 = vrcp.pop %v23
    %v25 = vmul.f32 %v23, %v24
    %v26 = vsub.f32 1.0, %v25
    %v27 = vmul.f32 %v24, %v26
    %v28 = vadd.f32 %v24, %v27
    %vm29 = vweird.f32 %v23
    %vm30 = vweird.f32 %v24
    %vm31 = vmor %vm29, %vm30
    %v32 = vsel %vm31, %v24, %v28
    %v33 = vand.u32 2147483647, %v23
    %vm34 = vcmp.eq.f32.partialorder %v33, 8.507059e+37
    %v35 = vand.u32 %v23, 2147483648
    %v36 = vor.u32 1.1754944e-38, %v35
    %v37 = vsel %vm34, %v36, %v32
    %v38 = vmul.f32 1.0, %v37
    %v39 = vmul.f32 %v38, %v17
    %v40 = vmul.f32 %v39, %v17
    %v41 = vsub.f32 0.0, %v40
    %v42 = vmul.f32 %v38, %v20
    %v43 = vmul.f32 %v42, %v20
    %v44 = vsub.f32 0.0, %v43
    %v45 = vmul.f32 %v14, %v38
    %v46 = vmul.f32 %v45, 2.0
    %v47 = vmul.f32 %v17, %v20
    %v48 = vmul.f32 %v46, %v47
    %v49 = vld [vmem:[%s1] sm:$0xff]
    %v50 = vld [vmem:[%s1 + $0x8] sm:$0x1]
    %52 = vset.pattern.permute.xlu0 0
    %53 = vperm.xlu0 %52, %v49
    %v54 = vpop.permute.xlu0 %53
    %57 = vset.pattern.permute.xlu0 0
    %58 = vperm.xlu0 %57, %v50
    %v59 = vpop.permute.xlu0 %58
    %v61 = vperm.slane %v41, 0
    %v62 = vmul.f32 %v54, %v61
    %v63 = vmul.f32 %v59, %v61
    %64 = vset.pattern.permute.xlu0 1
    %65 = vperm.xlu0 %64, %v49
    %v66 = vpop.permute.xlu0 %65
    %68 = vset.pattern.permute.xlu0 1
    %69 = vperm.xlu0 %68, %v50
    %v70 = vpop.permute.xlu0 %69
    %v72 = vperm.slane %v48, 0
    %v73 = vmul.f32 %v66, %v72
    %v74 = vmul.f32 %v70, %v72
    %v75 = vadd.f32 %v62, %v73
    %v76 = vadd.f32 %v63, %v74
    %77 = vset.pattern.permute.xlu0 2
    %78 = vperm.xlu0 %77, %v49
    %v79 = vpop.permute.xlu0 %78
    %81 = vset.pattern.permute.xlu0 2
    %82 = vperm.xlu0 %81, %v50
    %v83 = vpop.permute.xlu0 %82
    %v85 = vperm.slane %v44, 0
    %v86 = vmul.f32 %v79, %v85
    %v87 = vmul.f32 %v83, %v85
    %v88 = vadd.f32 %v75, %v86
    %v89 = vadd.f32 %v76, %v87
    %vm90 = vcmask 244736
    %91 = vst.msk [vmem:[#allocation2] sm:$0xff] %vm90, %v88
    %vm92 = vcmask 237568
    %93 = vst.msk [vmem:[#allocation2 + $0x8] sm:$0x1] %vm92, %v89
    // Predicated region
    $region10: #{tpu_custom_call.1} parent=1 // pred_check
      _
    $region11: #{tpu_custom_call.1} parent=1 // pred_check_branch
      %95 = sbr.rel (0) target = $region13
    $region12: #{tpu_custom_call.1} parent=1 // pred_region
      %97 = vsyncadd [#allocation3], 0
      %s98 = sshll.u32 [#allocation2], 4
      %s99 = int_to_ptr.vmem [resolvable:$true] %s98
      %s100 = sshll.u32 %s2, 4
      %s101 = int_to_ptr.hbm [resolvable:$true] %s100
      %106 = dma.vmem_to_hbm [thread:$0]  %s99, 256, %s101, [#allocation3], 128, 128, 8
    $region13: #{tpu_custom_call.1} parent=1 // pred_fallthru
      _
    // Predicated region
    $region14: #{tpu_custom_call.1} parent=1 // pred_check
      _
    $region15: #{tpu_custom_call.1} parent=1 // pred_check_branch
      %108 = sbr.rel (0) target = $region17
    $region16: #{tpu_custom_call.1} parent=1 // pred_region
      %110 = dma.done [#allocation3], 256
    $region17: #{tpu_custom_call.1} parent=1 // pred_fallthru
      _
    %111 = vsyncpa [#allocation3], 1

</llo_original>
